<compile_context>
chip_gen: v6e
topology: v6e:2x2x1
jax: 0.10.0
libtpu: 0.0.40
codegen_flags: <defaults>
</compile_context>

<pallas_src>
import functools

import jax
import jax.numpy as jnp
from jax.experimental import pallas as pl
from jax.experimental.pallas import tpu as pltpu


# ----------------------------------------------------------------------------
# Tile-size selection (VMEM-footprint aware, megacore friendly).
# ----------------------------------------------------------------------------
def _round_up(v, m):
    return ((v + m - 1) // m) * m


def _lane_pad(d):
    # The last (lane) dim of a VMEM buffer is padded to a multiple of 128.
    return _round_up(max(d, 1), 128)


_VMEM_LIMIT_BYTES = 48 << 20   # explicit scoped-VMEM limit (v7x physical = 64 MiB)
_VMEM_TILE_BUDGET = 24 << 20   # per-grid-step footprint target (~2x headroom)


def _choose_tile_m(n, feature_dims, act_bytes, param_bytes):
    """Largest batch tile whose per-step VMEM footprint fits the budget.

    Once the batch is large enough to split, cap the tile so the grid has at
    least 2 steps (both v7x TensorCores busy; no-op on v5e/v6e).
    """
    n_pad = _round_up(n, 8)
    cap = n_pad if n < 512 else _round_up(pl.cdiv(n, 2), 8)

    in_pad = _lane_pad(feature_dims[0])
    out_pad = _lane_pad(feature_dims[-1])
    widest = max(_lane_pad(d) for d in feature_dims)

    tile_m = min(cap, 8)
    for cand in (8192, 4096, 2048, 1024, 512, 256, 128, 64, 32, 16, 8):
        if cand > cap:
            continue
        footprint = (
            2 * cand * in_pad * act_bytes   # x tile, double-buffered (bf16)
            + 2 * cand * out_pad * 4        # out tile, double-buffered (f32)
            + 4 * cand * widest * 4         # f32 layer intermediates / temporaries
            + param_bytes                   # resident (double-buffered) params
        )
        if footprint <= _VMEM_TILE_BUDGET:
            tile_m = cand
            break
    # Never use a tile wider than the batch; a full-extent block is always
    # legal w.r.t. the (sublane, lane) divisibility rule.
    return min(tile_m, n)


# ----------------------------------------------------------------------------
# Fused kernel: chain of (dot + bias [+ relu]) layers, final softmax(dim=1).
# ----------------------------------------------------------------------------
def _fused_mlp_kernel(*refs, activations, compute_dtype):
    """refs = (x_ref, w0_ref, b0_ref, w1_ref, b1_ref, ..., o_ref)."""
    x_ref = refs[0]
    o_ref = refs[-1]
    p_refs = refs[1:-1]

    out = x_ref[...]                              # compute_dtype (bf16)
    for li, act in enumerate(activations):
        w = p_refs[2 * li][...]                   # (in, out), compute_dtype
        b = p_refs[2 * li + 1][...]               # (1, out), float32
        out = jnp.dot(out.astype(compute_dtype), w,
                      preferred_element_type=jnp.float32) + b
        if act == "relu":
            out = jnp.maximum(out, 0.0)

    # Softmax over the feature axis (nn.Softmax(dim=1)), all in f32.
    m = jnp.max(out, axis=1, keepdims=True)
    e = jnp.exp(out - m)
    denom = jnp.sum(e, axis=1, keepdims=True)
    out = e * pl.reciprocal(denom, approx=False)  # exact: rows sum to 1 ~1e-7
    o_ref[...] = out.astype(o_ref.dtype)


def fused_mlp_forward(x, layers, *, compute_dtype=jnp.bfloat16):
    """layers: list of (w (in,out), b (1,out), activation) applied in order,
    followed by a softmax over dim=1. Entire network in one pallas_call,
    tiled only over the batch axis."""
    n, in_dim = x.shape
    out_dim = layers[-1][0].shape[1]
    activations = tuple(act for (_, _, act) in layers)

    flat_params = []
    feature_dims = [in_dim]
    param_bytes = 0
    for w, b, _ in layers:
        flat_params += [w, b]
        feature_dims.append(w.shape[1])
        param_bytes += 2 * (w.size * w.dtype.itemsize + b.size * b.dtype.itemsize)

    # Stream the batch in the compute dtype (halves HBM bytes of the only
    # large operand). Accumulation / bias / softmax stay f32 in-kernel.
    x = x.astype(compute_dtype)
    act_bytes = jnp.dtype(compute_dtype).itemsize

    tile_m = _choose_tile_m(n, feature_dims, act_bytes, param_bytes)
    grid = (pl.cdiv(n, tile_m),)

    # x / out stream by row-tile; weights & biases map to block (0, 0) every
    # step -> DMAed once, resident across the whole grid.
    in_specs = [pl.BlockSpec((tile_m, in_dim), lambda i: (i, 0))]
    for w, b, _ in layers:
        in_specs.append(pl.BlockSpec(w.shape, lambda i: (0, 0)))
        in_specs.append(pl.BlockSpec(b.shape, lambda i: (0, 0)))
    out_specs = pl.BlockSpec((tile_m, out_dim), lambda i: (i, 0))

    kernel = functools.partial(_fused_mlp_kernel, activations=activations,
                               compute_dtype=compute_dtype)
    return pl.pallas_call(
        kernel,
        out_shape=jax.ShapeDtypeStruct((n, out_dim), jnp.float32),
        grid=grid,
        in_specs=in_specs,
        out_specs=out_specs,
        compiler_params=pltpu.CompilerParams(
            dimension_semantics=("parallel",),
            vmem_limit_bytes=_VMEM_LIMIT_BYTES),
    )(x, *flat_params)


# ----------------------------------------------------------------------------
# Deterministic parameter construction (mirrors NeuralNet.__init__ shapes).
# Weights stored (in, out) so y = x @ W + b == torch's x @ weight.T + bias.
# ----------------------------------------------------------------------------
def _init_linear(key, in_dim, out_dim, dtype):
    kw, kb = jax.random.split(key)
    bound = 1.0 / (in_dim ** 0.5)  # torch.nn.Linear default init scheme
    w = jax.random.uniform(kw, (in_dim, out_dim), jnp.float32, -bound, bound)
    b = jax.random.uniform(kb, (1, out_dim), jnp.float32, -bound, bound)
    return w.astype(dtype), b  # weights in compute dtype, biases stay f32


class NeuralNetPallas:
    def __init__(self, input_size, hidden_sizes, predict_binding_site=False,
                 binding_site_sizes=None, key=None,
                 compute_dtype=jnp.bfloat16):
        if predict_binding_site and binding_site_sizes is None:
            raise Exception(
                "Provide the structure for binding_site hidden layers!")
        self.predict_binding_site = predict_binding_site
        self.compute_dtype = compute_dtype
        key = jax.random.PRNGKey(0) if key is None else key
        keys = iter(jax.random.split(key, 64))

        # Trunk: fc1 + relu1, then fc{i+2} + relu{i+2}.
        trunk = [(*_init_linear(next(keys), input_size, hidden_sizes[0],
                                compute_dtype), "relu")]
        for i, hs in enumerate(hidden_sizes[1:]):
            trunk.append((*_init_linear(next(keys), hidden_sizes[i], hs,
                                        compute_dtype), "relu"))

        # Binding head: bs_fc1 (no relu), bs_fc{i+2}+relu, bs_out (-> 3).
        binding_head = []
        if binding_site_sizes is not None:
            binding_head.append(
                (*_init_linear(next(keys), hidden_sizes[-1],
                               binding_site_sizes[0], compute_dtype), "none"))
            for i, hs in enumerate(binding_site_sizes[1:]):
                binding_head.append(
                    (*_init_linear(next(keys), binding_site_sizes[i], hs,
                                   compute_dtype), "relu"))
            binding_head.append(
                (*_init_linear(next(keys), binding_site_sizes[-1], 3,
                               compute_dtype), "none"))

        # Non-binding head: Linear(hidden[-1], 2).
        non_binding_head = [(*_init_linear(next(keys), hidden_sizes[-1], 2,
                                           compute_dtype), "none")]

        # Full stacks (softmax is applied inside the fused kernel).
        self.layers_binding = (trunk + binding_head) if binding_head else None
        self.layers_non_binding = trunk + non_binding_head

    def __call__(self, x):
        layers = (self.layers_binding if self.predict_binding_site
                  else self.layers_non_binding)
        return fused_mlp_forward(x, layers, compute_dtype=self.compute_dtype)


# ----------------------------------------------------------------------------
# Pure-JAX references for validation.
#   compute_dtype=bf16  -> same mixed precision as the kernel (tight check)
#   compute_dtype=f32   -> torch-equivalent all-f32 forward (loose check)
# ----------------------------------------------------------------------------
def ref_forward(x, layers, compute_dtype=jnp.float32):
    out = x.astype(jnp.float32)
    for w, b, act in layers:
        out = jnp.dot(out.astype(compute_dtype), w.astype(compute_dtype),
                      preferred_element_type=jnp.float32) + b.astype(jnp.float32)
        if act == "relu":
            out = jnp.maximum(out, 0.0)
    return jax.nn.softmax(out, axis=1)


if __name__ == "__main__":
    key = jax.random.PRNGKey(0)
    k_x, k_params, k_big = jax.random.split(key, 3)

    batch = 8
    input_size = 32
    hidden_sizes = [64, 32]
    binding_site_sizes = [16, 8]

    x = jax.random.normal(k_x, (batch, input_size), dtype=jnp.float32)

    # Non-binding path: trunk -> Linear(hidden[-1], 2) -> Softmax(dim=1).
    model_nb = NeuralNetPallas(input_size, hidden_sizes,
                               predict_binding_site=False,
                               binding_site_sizes=binding_site_sizes,
                               key=k_params)
    out_nb = jax.block_until_ready(model_nb(x))
    assert out_nb.shape == (batch, 2)

    # Binding-site path: trunk -> bs head -> Linear(bs[-1], 3) -> Softmax.
    model_b = NeuralNetPallas(input_size, hidden_sizes,
                              predict_binding_site=True,
                              binding_site_sizes=binding_site_sizes,
                              key=k_params)
    out_b = jax.block_until_ready(model_b(x))
    assert out_b.shape == (batch, 3)

    # Softmax rows sum to 1 (f32 softmax with exact reciprocal in-kernel).
    assert jnp.allclose(jnp.sum(out_nb, axis=1), 1.0, atol=1e-5)
    assert jnp.allclose(jnp.sum(out_b, axis=1), 1.0, atol=1e-5)

    # Tight check against a reference using the same mixed precision.
    ref_nb = ref_forward(x, model_nb.layers_non_binding, jnp.bfloat16)
    ref_b = ref_forward(x, model_b.layers_binding, jnp.bfloat16)
    assert jnp.allclose(out_nb, ref_nb, atol=1e-3)
    assert jnp.allclose(out_b, ref_b, atol=1e-3)

    # Loose check against the all-f32 (torch-equivalent) reference.
    ref_nb_f32 = ref_forward(x, model_nb.layers_non_binding, jnp.float32)
    ref_b_f32 = ref_forward(x, model_b.layers_binding, jnp.float32)
    assert jnp.allclose(out_nb, ref_nb_f32, atol=3e-2)
    assert jnp.allclose(out_b, ref_b_f32, atol=3e-2)

    # Large, non-divisible batch: exercises cdiv tiling, ragged last block,
    # and a >= 2-step "parallel" grid (both TensorCores on v7x).
    x_big = jax.random.normal(k_big, (2000, input_size), dtype=jnp.float32)
    out_big = jax.block_until_ready(model_nb(x_big))
    assert out_big.shape == (2000, 2)
    assert jnp.allclose(jnp.sum(out_big, axis=1), 1.0, atol=1e-5)
    ref_big = ref_forward(x_big, model_nb.layers_non_binding, jnp.bfloat16)
    assert jnp.allclose(out_big, ref_big, atol=1e-3)

    print("KERNEL_OK")
</pallas_src>

<mosaic_0001>
module attributes {stable_mosaic.version = 11 : i64} {
  func.func @_fused_mlp_kernel(%arg0: i32, %arg1: memref<8x32xbf16, #tpu.memory_space<vmem>>, %arg2: memref<32x64xbf16, #tpu.memory_space<vmem>>, %arg3: memref<1x64xf32, #tpu.memory_space<vmem>>, %arg4: memref<64x32xbf16, #tpu.memory_space<vmem>>, %arg5: memref<1x32xf32, #tpu.memory_space<vmem>>, %arg6: memref<32x2xbf16, #tpu.memory_space<vmem>>, %arg7: memref<1x2xf32, #tpu.memory_space<vmem>>, %arg8: memref<8x2xf32, #tpu.memory_space<vmem>>) attributes {dimension_semantics = [#tpu.dimension_semantics<parallel>], iteration_bounds = array<i64: 1>, scalar_prefetch = 0 : i64, scratch_operands = 0 : i64, tpu.core_type = #tpu.core_type<tc>, window_params = [{transform_indices = @transform_0, window_bounds = array<i64: 8, 32>}, {pipeline_mode = #tpu.pipeline_mode<synchronous>, transform_indices = @transform_1, window_bounds = array<i64: 32, 64>}, {pipeline_mode = #tpu.pipeline_mode<synchronous>, transform_indices = @transform_2, window_bounds = array<i64: 1, 64>}, {pipeline_mode = #tpu.pipeline_mode<synchronous>, transform_indices = @transform_3, window_bounds = array<i64: 64, 32>}, {pipeline_mode = #tpu.pipeline_mode<synchronous>, transform_indices = @transform_4, window_bounds = array<i64: 1, 32>}, {pipeline_mode = #tpu.pipeline_mode<synchronous>, transform_indices = @transform_5, window_bounds = array<i64: 32, 2>}, {pipeline_mode = #tpu.pipeline_mode<synchronous>, transform_indices = @transform_6, window_bounds = array<i64: 1, 2>}, {transform_indices = @transform_7, window_bounds = array<i64: 8, 2>}]} {
    %c0 = arith.constant 0 : index
    %c0_0 = arith.constant 0 : index
    %0 = vector.load %arg1[%c0, %c0_0] : memref<8x32xbf16, #tpu.memory_space<vmem>>, vector<8x32xbf16>
    %c0_1 = arith.constant 0 : index
    %c0_2 = arith.constant 0 : index
    %1 = vector.load %arg2[%c0_1, %c0_2] : memref<32x64xbf16, #tpu.memory_space<vmem>>, vector<32x64xbf16>
    %c0_3 = arith.constant 0 : index
    %c0_4 = arith.constant 0 : index
    %2 = vector.load %arg3[%c0_3, %c0_4] : memref<1x64xf32, #tpu.memory_space<vmem>>, vector<1x64xf32>
    %cst = arith.constant dense<0.000000e+00> : vector<8x64xf32>
    %3 = tpu.matmul %0, %1, %cst {dimension_numbers = #tpu.dot_dimension_numbers<[1], [0], [0], [1], [0, 0, 1, 1], [], []>} : vector<8x32xbf16>, vector<32x64xbf16>, vector<8x64xf32> -> vector<8x64xf32>
    %4 = vector.broadcast %2 : vector<1x64xf32> to vector<8x64xf32>
    %5 = arith.addf %3, %4 : vector<8x64xf32>
    %cst_5 = arith.constant 0.000000e+00 : f32
    %6 = vector.broadcast %cst_5 : f32 to vector<8x64xf32>
    %7 = arith.maximumf %5, %6 : vector<8x64xf32>
    %c0_6 = arith.constant 0 : index
    %c0_7 = arith.constant 0 : index
    %8 = vector.load %arg4[%c0_6, %c0_7] : memref<64x32xbf16, #tpu.memory_space<vmem>>, vector<64x32xbf16>
    %c0_8 = arith.constant 0 : index
    %c0_9 = arith.constant 0 : index
    %9 = vector.load %arg5[%c0_8, %c0_9] : memref<1x32xf32, #tpu.memory_space<vmem>>, vector<1x32xf32>
    %10 = arith.truncf %7 : vector<8x64xf32> to vector<8x64xbf16>
    %cst_10 = arith.constant dense<0.000000e+00> : vector<8x32xf32>
    %11 = tpu.matmul %10, %8, %cst_10 {dimension_numbers = #tpu.dot_dimension_numbers<[1], [0], [0], [1], [0, 0, 1, 1], [], []>} : vector<8x64xbf16>, vector<64x32xbf16>, vector<8x32xf32> -> vector<8x32xf32>
    %12 = vector.broadcast %9 : vector<1x32xf32> to vector<8x32xf32>
    %13 = arith.addf %11, %12 : vector<8x32xf32>
    %cst_11 = arith.constant 0.000000e+00 : f32
    %14 = vector.broadcast %cst_11 : f32 to vector<8x32xf32>
    %15 = arith.maximumf %13, %14 : vector<8x32xf32>
    %c0_12 = arith.constant 0 : index
    %c0_13 = arith.constant 0 : index
    %16 = vector.load %arg6[%c0_12, %c0_13] : memref<32x2xbf16, #tpu.memory_space<vmem>>, vector<32x2xbf16>
    %c0_14 = arith.constant 0 : index
    %c0_15 = arith.constant 0 : index
    %17 = vector.load %arg7[%c0_14, %c0_15] : memref<1x2xf32, #tpu.memory_space<vmem>>, vector<1x2xf32>
    %18 = arith.truncf %15 : vector<8x32xf32> to vector<8x32xbf16>
    %cst_16 = arith.constant dense<0.000000e+00> : vector<8x2xf32>
    %19 = tpu.matmul %18, %16, %cst_16 {dimension_numbers = #tpu.dot_dimension_numbers<[1], [0], [0], [1], [0, 0, 1, 1], [], []>} : vector<8x32xbf16>, vector<32x2xbf16>, vector<8x2xf32> -> vector<8x2xf32>
    %20 = vector.broadcast %17 : vector<1x2xf32> to vector<8x2xf32>
    %21 = arith.addf %19, %20 : vector<8x2xf32>
    %cst_17 = arith.constant dense<0xFF800000> : vector<8xf32>
    %22 = vector.multi_reduction <maximumf>, %21, %cst_17 [1] : vector<8x2xf32> to vector<8xf32>
    %23 = vector.shape_cast %22 : vector<8xf32> to vector<8x1xf32>
    %24 = vector.broadcast %23 : vector<8x1xf32> to vector<8x2xf32>
    %25 = arith.subf %21, %24 : vector<8x2xf32>
    %26 = math.exp %25 : vector<8x2xf32>
    %cst_18 = arith.constant dense<0.000000e+00> : vector<8xf32>
    %27 = vector.multi_reduction <add>, %26, %cst_18 [1] : vector<8x2xf32> to vector<8xf32>
    %28 = vector.shape_cast %27 : vector<8xf32> to vector<8x1xf32>
    %29 = tpu.reciprocal %28 : vector<8x1xf32> -> vector<8x1xf32>
    %30 = vector.broadcast %29 : vector<8x1xf32> to vector<8x2xf32>
    %31 = arith.mulf %26, %30 : vector<8x2xf32>
    %c0_19 = arith.constant 0 : index
    %c0_20 = arith.constant 0 : index
    %32 = vector.load %arg8[%c0_19, %c0_20] : memref<8x2xf32, #tpu.memory_space<vmem>>, vector<8x2xf32>
    tpu.vector_store %arg8[%c0_19, %c0_20], %31 {strides = array<i32>} : memref<8x2xf32, #tpu.memory_space<vmem>>, vector<8x2xf32>,
    return
  }
  func.func @transform_0(%arg0: i32) -> (i32, i32) {
    %c0_i32 = arith.constant 0 : i32
    %c0_i32_0 = arith.constant 0 : i32
    return %arg0, %c0_i32 : i32, i32
  }
  func.func @transform_1(%arg0: i32) -> (i32, i32) {
    %c0_i32 = arith.constant 0 : i32
    %c0_i32_0 = arith.constant 0 : i32
    %c0_i32_1 = arith.constant 0 : i32
    return %c0_i32, %c0_i32_0 : i32, i32
  }
  func.func @transform_2(%arg0: i32) -> (i32, i32) {
    %c0_i32 = arith.constant 0 : i32
    %c0_i32_0 = arith.constant 0 : i32
    %c0_i32_1 = arith.constant 0 : i32
    return %c0_i32, %c0_i32_0 : i32, i32
  }
  func.func @transform_3(%arg0: i32) -> (i32, i32) {
    %c0_i32 = arith.constant 0 : i32
    %c0_i32_0 = arith.constant 0 : i32
    %c0_i32_1 = arith.constant 0 : i32
    return %c0_i32, %c0_i32_0 : i32, i32
  }
  func.func @transform_4(%arg0: i32) -> (i32, i32) {
    %c0_i32 = arith.constant 0 : i32
    %c0_i32_0 = arith.constant 0 : i32
    %c0_i32_1 = arith.constant 0 : i32
    return %c0_i32, %c0_i32_0 : i32, i32
  }
  func.func @transform_5(%arg0: i32) -> (i32, i32) {
    %c0_i32 = arith.constant 0 : i32
    %c0_i32_0 = arith.constant 0 : i32
    %c0_i32_1 = arith.constant 0 : i32
    return %c0_i32, %c0_i32_0 : i32, i32
  }
  func.func @transform_6(%arg0: i32) -> (i32, i32) {
    %c0_i32 = arith.constant 0 : i32
    %c0_i32_0 = arith.constant 0 : i32
    %c0_i32_1 = arith.constant 0 : i32
    return %c0_i32, %c0_i32_0 : i32, i32
  }
  func.func @transform_7(%arg0: i32) -> (i32, i32) {
    %c0_i32 = arith.constant 0 : i32
    %c0_i32_0 = arith.constant 0 : i32
    return %arg0, %c0_i32 : i32, i32
  }
}

</mosaic_0001>

<llo_original>
// kernel: tpu_custom_call.1
$region0: #{tpu_custom_call.1}
  #allocation0 [shape = 'u32[]', space=smem, size = 0x4, offset = 0x4, fixed_abs, tag = 'smem constant byte address 0x4 - core index']
  #allocation1 [shape = 'u32[144,128]{1,0:T(1,128)}', space=vmem, size = 0x12000, scoped, tag = 'internal scratch']
  %s0 = inlined_call_operand.vmem [shape: bf16[8,32], index: 0, kind: input, shape index: {}]
  %s1 = inlined_call_operand.vmem [shape: bf16[32,64], index: 1, kind: input, shape index: {}]
  %s2 = inlined_call_operand.vmem [shape: f32[1,64], index: 2, kind: input, shape index: {}]
  %s3 = inlined_call_operand.vmem [shape: bf16[64,32], index: 3, kind: input, shape index: {}]
  %s4 = inlined_call_operand.vmem [shape: f32[1,32], index: 4, kind: input, shape index: {}]
  %s5 = inlined_call_operand.vmem [shape: bf16[32,2], index: 5, kind: input, shape index: {}]
  %s6 = inlined_call_operand.vmem [shape: f32[1,2], index: 6, kind: input, shape index: {}]
  %s7 = inlined_call_operand.vmem [shape: f32[8,2], index: 7, kind: output, shape index: {}]
  %s8 = sld [smem:[#allocation0]]
  $region38: #{tpu_custom_call.1} parent=0
    _
  %s10 = ssub.s32 1, %s8
  %s11 = scalar_select 0, %s10, %s8
  // Predicated region
  $region2: #{tpu_custom_call.1} parent=0 // pred_check
    _
  $region3: #{tpu_custom_call.1} parent=0 // pred_check_branch
    %13 = sbr.rel (0) target = $region5
  $region4: #{tpu_custom_call.1} parent=0 // pred_region
    _
  $region5: #{tpu_custom_call.1} parent=0 // pred_fallthru
    _
  // Predicated region
  $region6: #{tpu_custom_call.1} parent=0 // pred_check
    _
  $region7: #{tpu_custom_call.1} parent=0 // pred_check_branch
    %15 = sbr.rel (0) target = $region9
  $region8: #{tpu_custom_call.1} parent=0 // pred_region
    _
  $region9: #{tpu_custom_call.1} parent=0 // pred_fallthru
    _
  // Predicated region
  $region10: #{tpu_custom_call.1} parent=0 // pred_check
    _
  $region11: #{tpu_custom_call.1} parent=0 // pred_check_branch
    %17 = sbr.rel (0) target = $region13
  $region12: #{tpu_custom_call.1} parent=0 // pred_region
    _
  $region13: #{tpu_custom_call.1} parent=0 // pred_fallthru
    _
  // Predicated region
  $region14: #{tpu_custom_call.1} parent=0 // pred_check
    _
  $region15: #{tpu_custom_call.1} parent=0 // pred_check_branch
    %19 = sbr.rel (0) target = $region17
  $region16: #{tpu_custom_call.1} parent=0 // pred_region
    _
  $region17: #{tpu_custom_call.1} parent=0 // pred_fallthru
    _
  // Predicated region
  $region18: #{tpu_custom_call.1} parent=0 // pred_check
    _
  $region19: #{tpu_custom_call.1} parent=0 // pred_check_branch
    %21 = sbr.rel (0) target = $region21
  $region20: #{tpu_custom_call.1} parent=0 // pred_region
    _
  $region21: #{tpu_custom_call.1} parent=0 // pred_fallthru
    _
  // Predicated region
  $region22: #{tpu_custom_call.1} parent=0 // pred_check
    _
  $region23: #{tpu_custom_call.1} parent=0 // pred_check_branch
    %23 = sbr.rel (0) target = $region25
  $region24: #{tpu_custom_call.1} parent=0 // pred_region
    _
  $region25: #{tpu_custom_call.1} parent=0 // pred_fallthru
    _
  // Predicated region
  $region26: #{tpu_custom_call.1} parent=0 // pred_check
    _
  $region27: #{tpu_custom_call.1} parent=0 // pred_check_branch
    %25 = sbr.rel (0) target = $region29
  $region28: #{tpu_custom_call.1} parent=0 // pred_region
    _
  $region29: #{tpu_custom_call.1} parent=0 // pred_fallthru
    _
  %v27 = vld [vmem:[%s0] sm:$0xf]
  %v28 = vld [vmem:[%s1] sm:$0xf]
  %v29 = vld [vmem:[%s1 + $0x4] sm:$0xf]
  %v30 = vld [vmem:[%s1 + $0x8] sm:$0xf]
  %v31 = vld [vmem:[%s1 + $0xc] sm:$0xf]
  %v32 = vld [vmem:[%s2] sm:$0x1]
  %v34 = vlaneseq
  %v35 = vshrl.u32 %v34, 7
  %v36 = vsub.s32 0, %v35
  %v37 = vrot.slane %v32, %v36
  %v43 = vunpack.c.l.b16 %v28
  %v44 = vunpack.c.l.b16 %v29
  %v45 = vunpack.c.l.b16 %v30
  %v46 = vunpack.c.l.b16 %v31
  %v47 = vpack.c.b16 %v44, %v43
  %v48 = vpack.c.b16 %v46, %v45
  %vm51 = vcmask 261120
  %v53 = vsel %vm51, %v27, 0
  %55 = vmatprep.subr.bf16.mxu0 0
  %56 = vmatpush1.bf16.msra.mxu0 0
  %57 = vmatprep.subr.bf16.mxu0 0
  %58 = vmatpush1.bf16.msra.mxu0 0
  %59 = vmatprep.subr.bf16.mxu0 0
  %60 = vmatpush1.bf16.msra.mxu0 0
  %61 = vmatprep.subr.bf16.mxu0 0
  %62 = vmatpush1.bf16.msra.mxu0 0
  %63 = vmatprep.subr.bf16.mxu0 0
  %64 = vmatpush1.bf16.msra.mxu0 0
  %65 = vmatprep.subr.bf16.mxu0 0
  %66 = vmatpush1.bf16.msra.mxu0 0
  %67 = vmatprep.subr.bf16.mxu0 0
  %68 = vmatpush1.bf16.msra.mxu0 %v48
  %69 = vmatprep.subr.bf16.mxu0 0
  %70 = vmatpush1.bf16.msra.mxu0 %v47
  %71 = vmatprep.subr.bf16.mxu0 0
  %72 = vmatpush2.bf16.msra.mxu0 0
  %73 = vmatprep.subr.bf16.mxu0 0
  %74 = vmatpush2.bf16.msra.mxu0 0
  %75 = vmatprep.subr.bf16.mxu0 0
  %76 = vmatpush2.bf16.msra.mxu0 0
  %77 = vmatprep.subr.bf16.mxu0 0
  %78 = vmatpush2.bf16.msra.mxu0 0
  %79 = vmatprep.subr.bf16.mxu0 0
  %80 = vmatpush2.bf16.msra.mxu0 0
  %81 = vmatprep.subr.bf16.mxu0 0
  %82 = vmatpush2.bf16.msra.mxu0 0
  %83 = vmatprep.subr.bf16.mxu0 0
  %84 = vmatpush2.bf16.msra.mxu0 0
  %85 = vmatprep.subr.bf16.mxu0 0
  %86 = vmatpush2.bf16.msra.mxu0 0
  %87 = vmatprep.mubr.bf16.mxu0 0
  %88 = vmatmul.mubr.bf16.gmra.mxu0 %v53
  %v89 = vpop.f32.mrf.mxu0
  %v90 = vadd.f32 %v37, %v89
  %v91 = vpop.f32.mrf.mxu0
  %v92 = vpop.f32.mrf.mxu0
  %v93 = vpop.f32.mrf.mxu0
  %94 = vdwg.mxu0
  %v95 = vmax.f32 %v90, 0.0
  %v96 = vld [vmem:[%s3] sm:$0xf]
  %v97 = vld [vmem:[%s3 + $0x4] sm:$0xf]
  %v98 = vld [vmem:[%s3 + $0x8] sm:$0xf]
  %v99 = vld [vmem:[%s3 + $0xc] sm:$0xf]
  %v100 = vld [vmem:[%s3 + $0x10] sm:$0xf]
  %v101 = vld [vmem:[%s3 + $0x14] sm:$0xf]
  %v102 = vld [vmem:[%s3 + $0x18] sm:$0xf]
  %v103 = vld [vmem:[%s3 + $0x1c] sm:$0xf]
  %v104 = vld [vmem:[%s4] sm:$0x1]
  %v105 = vpack.c.bf16 %v95, %v95
  %v107 = vlaneseq
  %v108 = vshrl.u32 %v107, 7
  %v109 = vsub.s32 0, %v108
  %v110 = vrot.slane %v104, %v109
  %v120 = vunpack.c.l.b16 %v96
  %v121 = vunpack.c.l.b16 %v97
  %v122 = vunpack.c.l.b16 %v98
  %v123 = vunpack.c.l.b16 %v99
  %v124 = vunpack.c.l.b16 %v100
  %v125 = vunpack.c.l.b16 %v101
  %v126 = vunpack.c.l.b16 %v102
  %v127 = vunpack.c.l.b16 %v103
  %v128 = vpack.c.b16 %v121, %v120
  %v129 = vpack.c.b16 %v123, %v122
  %v130 = vpack.c.b16 %v125, %v124
  %v131 = vpack.c.b16 %v127, %v126
  %vm136 = vcmask 523264
  %v138 = vsel %vm136, %v105, 0
  %140 = vmatprep.subr.bf16.mxu0 0
  %141 = vmatpush1.bf16.msra.mxu0 0
  %142 = vmatprep.subr.bf16.mxu0 0
  %143 = vmatpush1.bf16.msra.mxu0 0
  %144 = vmatprep.subr.bf16.mxu0 0
  %145 = vmatpush1.bf16.msra.mxu0 0
  %146 = vmatprep.subr.bf16.mxu0 0
  %147 = vmatpush1.bf16.msra.mxu0 0
  %148 = vmatprep.subr.bf16.mxu0 0
  %149 = vmatpush1.bf16.msra.mxu0 %v131
  %150 = vmatprep.subr.bf16.mxu0 0
  %151 = vmatpush1.bf16.msra.mxu0 %v130
  %152 = vmatprep.subr.bf16.mxu0 0
  %153 = vmatpush1.bf16.msra.mxu0 %v129
  %154 = vmatprep.subr.bf16.mxu0 0
  %155 = vmatpush1.bf16.msra.mxu0 %v128
  %156 = vmatprep.subr.bf16.mxu0 0
  %157 = vmatpush2.bf16.msra.mxu0 0
  %158 = vmatprep.subr.bf16.mxu0 0
  %159 = vmatpush2.bf16.msra.mxu0 0
  %160 = vmatprep.subr.bf16.mxu0 0
  %161 = vmatpush2.bf16.msra.mxu0 0
  %162 = vmatprep.subr.bf16.mxu0 0
  %163 = vmatpush2.bf16.msra.mxu0 0
  %164 = vmatprep.subr.bf16.mxu0 0
  %165 = vmatpush2.bf16.msra.mxu0 0
  %166 = vmatprep.subr.bf16.mxu0 0
  %167 = vmatpush2.bf16.msra.mxu0 0
  %168 = vmatprep.subr.bf16.mxu0 0
  %169 = vmatpush2.bf16.msra.mxu0 0
  %170 = vmatprep.subr.bf16.mxu0 0
  %171 = vmatpush2.bf16.msra.mxu0 0
  %172 = vmatprep.mubr.bf16.mxu0 0
  %173 = vmatmul.mubr.bf16.gmra.mxu0 %v138
  %v174 = vpop.f32.mrf.mxu0
  %v175 = vadd.f32 %v110, %v174
  %v176 = vpop.f32.mrf.mxu0
  %v177 = vpop.f32.mrf.mxu0
  %v178 = vpop.f32.mrf.mxu0
  %179 = vdwg.mxu0
  %v180 = vmax.f32 %v175, 0.0
  %v181 = vld [vmem:[%s5] sm:$0xf]
  %v182 = vld [vmem:[%s5 + $0x4] sm:$0xf]
  %v183 = vld [vmem:[%s5 + $0x8] sm:$0xf]
  %v184 = vld [vmem:[%s5 + $0xc] sm:$0xf]
  %v185 = vld [vmem:[%s6] sm:$0x1]
  %v186 = vpack.c.bf16 %v180, %v180
  %v188 = vlaneseq
  %v189 = vshrl.u32 %v188, 7
  %v190 = vsub.s32 0, %v189
  %v191 = vrot.slane %v185, %v190
  %v197 = vunpack.c.l.b16 %v181
  %v198 = vunpack.c.l.b16 %v182
  %v199 = vunpack.c.l.b16 %v183
  %v200 = vunpack.c.l.b16 %v184
  %v201 = vpack.c.b16 %v198, %v197
  %v202 = vpack.c.b16 %v200, %v199
  %v206 = vsel %vm51, %v186, 0
  %208 = vmatprep.subr.bf16.mxu0 0
  %209 = vmatpush1.bf16.msra.mxu0 0
  %210 = vmatprep.subr.bf16.mxu0 0
  %211 = vmatpush1.bf16.msra.mxu0 0
  %212 = vmatprep.subr.bf16.mxu0 0
  %213 = vmatpush1.bf16.msra.mxu0 0
  %214 = vmatprep.subr.bf16.mxu0 0
  %215 = vmatpush1.bf16.msra.mxu0 0
  %216 = vmatprep.subr.bf16.mxu0 0
  %217 = vmatpush1.bf16.msra.mxu0 0
  %218 = vmatprep.subr.bf16.mxu0 0
  %219 = vmatpush1.bf16.msra.mxu0 0
  %220 = vmatprep.subr.bf16.mxu0 0
  %221 = vmatpush1.bf16.msra.mxu0 %v202
  %222 = vmatprep.subr.bf16.mxu0 0
  %223 = vmatpush1.bf16.msra.mxu0 %v201
  %224 = vmatprep.subr.bf16.mxu0 0
  %225 = vmatpush2.bf16.msra.mxu0 0
  %226 = vmatprep.subr.bf16.mxu0 0
  %227 = vmatpush2.bf16.msra.mxu0 0
  %228 = vmatprep.subr.bf16.mxu0 0
  %229 = vmatpush2.bf16.msra.mxu0 0
  %230 = vmatprep.subr.bf16.mxu0 0
  %231 = vmatpush2.bf16.msra.mxu0 0
  %232 = vmatprep.subr.bf16.mxu0 0
  %233 = vmatpush2.bf16.msra.mxu0 0
  %234 = vmatprep.subr.bf16.mxu0 0
  %235 = vmatpush2.bf16.msra.mxu0 0
  %236 = vmatprep.subr.bf16.mxu0 0
  %237 = vmatpush2.bf16.msra.mxu0 0
  %238 = vmatprep.subr.bf16.mxu0 0
  %239 = vmatpush2.bf16.msra.mxu0 0
  %240 = vmatprep.mubr.bf16.mxu0 0
  %241 = vmatmul.mubr.bf16.gmra.mxu0 %v206
  %v242 = vpop.f32.mrf.mxu0
  %v243 = vadd.f32 %v191, %v242
  %v244 = vpop.f32.mrf.mxu0
  %v245 = vpop.f32.mrf.mxu0
  %v246 = vpop.f32.mrf.mxu0
  %247 = vdwg.mxu0
  %vm248 = vcmask 15360
  %v249 = vsel %vm248, %v243, -inf
  %250 = vmax.xlane.f32.xlu0 %v249
  %v251 = vpop.xlane.xlu0 %250
  %v252 = vsub.f32 %v243, %v251
  %v253 = vmul.f32 %v252, 1.442695
  %v254 = vpow.pop %v253
  %v255 = vsel %vm248, %v254, 0.0
  %256 = vadd.xlane.f32.xlu0 %v255
  %v257 = vpop.xlane.xlu0 %256
  %v258 = vrcp.pop %v257
  %v259 = vmul.f32 %v254, %v258
  %260 = vst.msk [vmem:[%s7] sm:$0xff] %vm248, %v259
  // Predicated region
  $region30: #{tpu_custom_call.1} parent=0 // pred_check
    _
  $region31: #{tpu_custom_call.1} parent=0 // pred_check_branch
    %262 = sbr.rel (0) target = $region33
  $region32: #{tpu_custom_call.1} parent=0 // pred_region
    _
  $region33: #{tpu_custom_call.1} parent=0 // pred_fallthru
    _
  // Predicated region
  $region34: #{tpu_custom_call.1} parent=0 // pred_check
    _
  $region35: #{tpu_custom_call.1} parent=0 // pred_check_branch
    %264 = sbr.rel (0) target = $region37
  $region36: #{tpu_custom_call.1} parent=0 // pred_region
    _
  $region37: #{tpu_custom_call.1} parent=0 // pred_fallthru
    _

</llo_original>
